<compile_context>
chip_gen: v5e
topology: v5e:2x2
jax: 0.10.0
libtpu: 0.0.40
codegen_flags: <defaults>
</compile_context>

<pallas_src>
import functools

import jax
import jax.numpy as jnp
from jax.experimental import pallas as pl
from jax.experimental.pallas import tpu as pltpu

_ACT_DTYPE = jnp.bfloat16       # activations / weights on the MXU
_MAX_TK = 2048                  # cap on the K-reduction tile
_VMEM_LIMIT = 48 * 1024 * 1024  # leaves headroom even on v7x's 64 MiB VMEM


def _round_up(x, m):
    return ((x + m - 1) // m) * m


# ---------------------------------------------------------------------------
# Pallas kernels: tiled matmul + K-reduction accumulator + fused epilogue
# (shift [+ residual] [+ ReLU]).  BN scale is pre-folded into the weights.
# ---------------------------------------------------------------------------
def _mm_kernel(p_ref, w_ref, shift_ref, o_ref, acc_ref, *, relu):
    @pl.when(pl.program_id(2) == 0)
    def _():
        acc_ref[...] = jnp.zeros_like(acc_ref)

    acc_ref[...] += jnp.dot(p_ref[...], w_ref[...],
                            preferred_element_type=jnp.float32)

    @pl.when(pl.program_id(2) == pl.num_programs(2) - 1)
    def _():
        y = acc_ref[...] + shift_ref[...]
        if relu:
            y = jnp.maximum(y, 0.0)
        o_ref[...] = y.astype(o_ref.dtype)


def _mm_res_kernel(p_ref, w_ref, shift_ref, res_ref, o_ref, acc_ref, *, relu):
    @pl.when(pl.program_id(2) == 0)
    def _():
        acc_ref[...] = jnp.zeros_like(acc_ref)

    acc_ref[...] += jnp.dot(p_ref[...], w_ref[...],
                            preferred_element_type=jnp.float32)

    @pl.when(pl.program_id(2) == pl.num_programs(2) - 1)
    def _():
        y = acc_ref[...] + shift_ref[...] + res_ref[...].astype(jnp.float32)
        if relu:
            y = jnp.maximum(y, 0.0)
        o_ref[...] = y.astype(o_ref.dtype)


def fused_matmul(patches, wmat, shift, residual=None, *, relu=False):
    """patches (M,K) bf16 @ wmat (K,Cout) bf16, + shift (+res) (+ReLU) -> (M,Cout) bf16."""
    M, K = patches.shape
    _, Cout = wmat.shape

    # ---- tile / pad plan ---------------------------------------------------
    cout_p = _round_up(Cout, 128)                    # lane-dense output stores
    tn = 256 if (cout_p % 256 == 0) else 128         # feed v6e/v7x 256-wide MXU
    tm = 256 if M >= 256 else _round_up(M, 8)
    m_p = _round_up(M, tm)

    if K <= _MAX_TK:
        tk, k_p = K, K                               # single reduction step
    else:
        nks = -(-K // _MAX_TK)
        tk = _round_up(-(-K // nks), 128)
        k_p = tk * nks
    nk = k_p // tk

    if (m_p, k_p) != (M, K):
        patches = jnp.pad(patches, ((0, m_p - M), (0, k_p - K)))
    if (k_p, cout_p) != (K, Cout):
        wmat = jnp.pad(wmat, ((0, k_p - K), (0, cout_p - Cout)))
    shift2 = jnp.pad(shift.astype(jnp.float32),
                     (0, cout_p - Cout)).reshape(1, cout_p)

    in_specs = [
        pl.BlockSpec((tm, tk), lambda i, j, k: (i, k)),
        pl.BlockSpec((tk, tn), lambda i, j, k: (k, j)),
        pl.BlockSpec((1, tn), lambda i, j, k: (0, j)),
    ]
    args = [patches, wmat, shift2]
    if residual is None:
        kern = functools.partial(_mm_kernel, relu=relu)
    else:
        res = residual
        if (m_p, cout_p) != res.shape:
            res = jnp.pad(res, ((0, m_p - res.shape[0]),
                                (0, cout_p - res.shape[1])))
        in_specs.append(pl.BlockSpec((tm, tn), lambda i, j, k: (i, j)))
        args.append(res)
        kern = functools.partial(_mm_res_kernel, relu=relu)

    flops = 2 * m_p * k_p * cout_p
    bytes_accessed = 2 * (m_p * k_p + k_p * cout_p + m_p * cout_p) + 4 * cout_p

    out = pl.pallas_call(
        kern,
        out_shape=jax.ShapeDtypeStruct((m_p, cout_p), _ACT_DTYPE),
        grid=(m_p // tm, cout_p // tn, nk),
        in_specs=in_specs,
        out_specs=pl.BlockSpec((tm, tn), lambda i, j, k: (i, j)),
        scratch_shapes=[pltpu.VMEM((tm, tn), jnp.float32)],
        compiler_params=pltpu.CompilerParams(
            dimension_semantics=("parallel", "parallel", "arbitrary"),
            vmem_limit_bytes=_VMEM_LIMIT,
        ),
        cost_estimate=pl.CostEstimate(
            flops=flops, transcendentals=0, bytes_accessed=bytes_accessed),
    )(*args)

    if (m_p, cout_p) != (M, Cout):
        out = out[:M, :Cout]
    return out


def conv2d(x, w, shift, *, stride=1, padding=0, dilation=1,
           relu=False, residual=None):
    """x: (N,H,W,Cin) bf16.  w: (KH,KW,Cin,Cout) bf16 (BN scale pre-folded).
    shift: (Cout,) f32.  Returns (N,Ho,Wo,Cout) bf16."""
    N, H, W, Cin = x.shape
    KH, KW, _, Cout = w.shape
    Ho = (H + 2 * padding - dilation * (KH - 1) - 1) // stride + 1
    Wo = (W + 2 * padding - dilation * (KW - 1) - 1) // stride + 1
    M = N * Ho * Wo

    if KH == 1 and KW == 1:
        # 1x1 conv: no im2col at all — (optionally strided) slice + reshape.
        xs = x[:, ::stride, ::stride, :] if stride > 1 else x
        patches = xs.reshape(M, Cin)
    else:
        # TODO(synk): for stride-1 convs this im2col could move inside the
        # kernel (haloed block DMA + in-kernel tap shifts) to cut HBM traffic
        # a further ~KH*KW-fold; kept as bf16 wrapper glue for robustness.
        xp = jnp.pad(x, ((0, 0), (padding, padding), (padding, padding), (0, 0)))
        cols = []
        for kh in range(KH):
            for kw in range(KW):
                sl = xp[:,
                        kh * dilation: kh * dilation + (Ho - 1) * stride + 1: stride,
                        kw * dilation: kw * dilation + (Wo - 1) * stride + 1: stride,
                        :]
                cols.append(sl)
        patches = jnp.concatenate(cols, axis=-1).reshape(M, KH * KW * Cin)

    wmat = w.reshape(KH * KW * Cin, Cout)
    res = None if residual is None else residual.reshape(M, Cout)
    out = fused_matmul(patches, wmat, shift, res, relu=relu)
    return out.reshape(N, Ho, Wo, Cout)


# ---------------------------------------------------------------------------
# Deterministic parameter construction (synthetic, PRNGKey(0))
# ---------------------------------------------------------------------------
class ParamGen:
    def __init__(self, seed=0):
        self.key = jax.random.PRNGKey(seed)

    def _next(self):
        self.key, k = jax.random.split(self.key)
        return k

    def conv_w(self, kh, kw, cin, cout, bias):
        w = 0.05 * jax.random.normal(self._next(), (kh, kw, cin, cout), jnp.float32)
        if bias:
            b = 0.05 * jax.random.normal(self._next(), (cout,), jnp.float32)
        else:
            b = jnp.zeros((cout,), jnp.float32)
        return w, b

    def bn(self, c, eps=1e-5):
        gamma = 1.0 + 0.1 * jax.random.normal(self._next(), (c,), jnp.float32)
        beta = 0.1 * jax.random.normal(self._next(), (c,), jnp.float32)
        rmean = 0.1 * jax.random.normal(self._next(), (c,), jnp.float32)
        rvar = 1.0 + 0.1 * jnp.abs(jax.random.normal(self._next(), (c,), jnp.float32))
        scale = gamma / jnp.sqrt(rvar + eps)
        shift = beta - rmean * scale
        return scale, shift


def make_conv(pg, cin, cout, k, *, stride=1, pad=0, dil=1,
              bias=True, bn=False, relu=False):
    w, b = pg.conv_w(k, k, cin, cout, bias)
    if bn:
        s, sh = pg.bn(cout)
        w = w * s.reshape(1, 1, 1, cout)      # fold BN scale into the weights
        shift = sh + s * b                    # conv bias folded through BN
    else:
        shift = b
    return dict(w=w.astype(_ACT_DTYPE), shift=shift.astype(jnp.float32),
                stride=stride, pad=pad, dil=dil, relu=relu)


def apply_conv(p, x, residual=None):
    return conv2d(x, p['w'], p['shift'],
                  stride=p['stride'], padding=p['pad'], dilation=p['dil'],
                  relu=p['relu'], residual=residual)


# torchvision ResNet BasicBlock (also used for the 21->21 edge-path blocks)
def make_basic_block(pg, cin, cout, stride=1):
    blk = {
        'conv1': make_conv(pg, cin, cout, 3, stride=stride, pad=1,
                           bias=False, bn=True, relu=True),
        # ReLU of conv2 applied AFTER the residual add, inside the kernel.
        'conv2': make_conv(pg, cout, cout, 3, stride=1, pad=1,
                           bias=False, bn=True, relu=True),
        'down': None,
    }
    if stride != 1 or cin != cout:
        blk['down'] = make_conv(pg, cin, cout, 1, stride=stride, pad=0,
                                bias=False, bn=True, relu=False)
    return blk


def apply_basic_block(blk, x):
    identity = x if blk['down'] is None else apply_conv(blk['down'], x)
    y = apply_conv(blk['conv1'], x)
    return apply_conv(blk['conv2'], y, residual=identity)


def make_layer(pg, cin, cout, stride):
    return [make_basic_block(pg, cin, cout, stride),
            make_basic_block(pg, cout, cout, 1)]


def apply_layer(layer, x):
    for blk in layer:
        x = apply_basic_block(blk, x)
    return x


# DeepLabV3+ style ASPP (output_stride 16 -> dilations 1/6/12/18).
# TODO(synk): the original build_aspp('resnet', 16, ...) expects 2048 input
# channels; here it is applied to h4 (512 ch) so inplanes=512 is used.
def make_aspp(pg, inplanes=512, out=256):
    return {
        'b1': make_conv(pg, inplanes, out, 1, bias=False, bn=True, relu=True),
        'b2': make_conv(pg, inplanes, out, 3, pad=6, dil=6, bias=False, bn=True, relu=True),
        'b3': make_conv(pg, inplanes, out, 3, pad=12, dil=12, bias=False, bn=True, relu=True),
        'b4': make_conv(pg, inplanes, out, 3, pad=18, dil=18, bias=False, bn=True, relu=True),
        'pool': make_conv(pg, inplanes, out, 1, bias=False, bn=True, relu=True),
        'proj': make_conv(pg, out * 5, out, 1, bias=False, bn=True, relu=True),
    }


def apply_aspp(a, x):
    N, H, W, _ = x.shape
    x1 = apply_conv(a['b1'], x)
    x2 = apply_conv(a['b2'], x)
    x3 = apply_conv(a['b3'], x)
    x4 = apply_conv(a['b4'], x)
    gp = jnp.mean(x.astype(jnp.float32), axis=(1, 2),
                  keepdims=True).astype(_ACT_DTYPE)    # AdaptiveAvgPool2d(1)
    x5 = apply_conv(a['pool'], gp)
    x5 = jnp.broadcast_to(x5, (N, H, W, x5.shape[-1]))  # bilinear from 1x1 == broadcast
    cat = jnp.concatenate([x1, x2, x3, x4, x5], axis=-1)
    y = apply_conv(a['proj'], cat)
    # Dropout(0.5): identity in eval/inference mode.
    return y


def upsample_bilinear(x, scale):
    # nn.Upsample(mode='bilinear', align_corners=False): half-pixel centers,
    # which matches jax.image.resize 'bilinear' for upsampling (glue).
    N, H, W, C = x.shape
    return jax.image.resize(x, (N, H * scale, W * scale, C),
                            method='bilinear').astype(x.dtype)


# ---------------------------------------------------------------------------
# Full model
# ---------------------------------------------------------------------------
def build_model(pg, n_channels=3):
    m = {}
    m['inconv'] = make_conv(pg, n_channels, 64, 3, pad=1, bias=True, bn=True, relu=True)
    m['enc1'] = make_layer(pg, 64, 64, 1)
    m['enc2'] = make_layer(pg, 64, 128, 2)
    m['enc3'] = make_layer(pg, 128, 256, 2)
    m['enc4'] = make_layer(pg, 256, 512, 2)
    m['aspp'] = make_aspp(pg, 512, 256)
    for i, cin in zip((1, 2, 3, 4), (64, 128, 256, 512)):
        m[f'conv{i}_1_down'] = make_conv(pg, cin, 21, 1, bias=True)
        m[f'conv{i}_2_down'] = make_basic_block(pg, 21, 21, 1)
        m[f'conv{i}_3_down'] = make_conv(pg, 21, 1, 3, pad=1, bias=True)
    m['edgev'] = make_conv(pg, 4, 1, 1, bias=True)
    m['edgef'] = make_conv(pg, 1, 1, 1, bias=True)
    m['cbr4d_1'] = make_conv(pg, 256 + 512, 512, 3, pad=1, bias=False, bn=True, relu=True)
    m['cbr4d_2'] = make_conv(pg, 512, 512, 3, pad=1, bias=False, bn=True, relu=True)
    m['cbr3d_1'] = make_conv(pg, 256 + 512, 512, 3, pad=1, bias=False, bn=True, relu=True)
    m['cbr3d_2'] = make_conv(pg, 512, 256, 3, pad=1, bias=False, bn=True, relu=True)
    m['cbr2d_1'] = make_conv(pg, 256 + 128, 256, 3, pad=1, bias=False, bn=True, relu=True)
    m['cbr2d_2'] = make_conv(pg, 256, 128, 3, pad=1, bias=False, bn=True, relu=True)
    m['cbr1d_1'] = make_conv(pg, 128 + 64, 128, 3, pad=1, bias=False, bn=True, relu=True)
    m['cbr1d_2'] = make_conv(pg, 128, 64, 3, pad=1, bias=False, bn=True, relu=True)
    m['outconv4'] = make_conv(pg, 512, 1, 3, pad=1, bias=True)
    m['outconv3'] = make_conv(pg, 256, 1, 3, pad=1, bias=True)
    m['outconv2'] = make_conv(pg, 128, 1, 3, pad=1, bias=True)
    m['outconv1'] = make_conv(pg, 64, 1, 3, pad=1, bias=True)
    return m


def forward(m, x_nchw):
    x = jnp.transpose(x_nchw, (0, 2, 3, 1)).astype(_ACT_DTYPE)  # NCHW -> NHWC bf16

    hx = apply_conv(m['inconv'], x)
    h1 = apply_layer(m['enc1'], hx)
    h2 = apply_layer(m['enc2'], h1)
    h3 = apply_layer(m['enc3'], h2)
    h4 = apply_layer(m['enc4'], h3)

    hbg = apply_aspp(m['aspp'], h4)

    # ---- decoder ----
    hx = apply_conv(m['cbr4d_1'], jnp.concatenate([hbg, h4], axis=-1))
    hd4 = apply_conv(m['cbr4d_2'], hx)
    hx = upsample_bilinear(hd4, 2)
    hx = apply_conv(m['cbr3d_1'], jnp.concatenate([hx, h3], axis=-1))
    hd3 = apply_conv(m['cbr3d_2'], hx)
    hx = upsample_bilinear(hd3, 2)
    hx = apply_conv(m['cbr2d_1'], jnp.concatenate([hx, h2], axis=-1))
    hd2 = apply_conv(m['cbr2d_2'], hx)
    hx = upsample_bilinear(hd2, 2)
    hx = apply_conv(m['cbr1d_1'], jnp.concatenate([hx, h1], axis=-1))
    hd1 = apply_conv(m['cbr1d_2'], hx)

    # ---- edge branch ----
    def down_branch(i, h):
        t = apply_conv(m[f'conv{i}_1_down'], h)
        t = apply_basic_block(m[f'conv{i}_2_down'], t)
        return apply_conv(m[f'conv{i}_3_down'], t)

    h1e = down_branch(1, h1)
    h2e = upsample_bilinear(down_branch(2, h2), 2)
    h3e = upsample_bilinear(down_branch(3, h3), 4)
    h4e = upsample_bilinear(down_branch(4, h4), 8)
    hx = jnp.concatenate([h1e, h2e, h3e, h4e], axis=-1)
    hx = apply_conv(m['edgev'], hx)
    fedge = apply_conv(m['edgef'], hx)

    # ---- side outputs ----
    d4 = upsample_bilinear(apply_conv(m['outconv4'], hd4), 8)
    d3 = upsample_bilinear(apply_conv(m['outconv3'], hd3), 4)
    d2 = upsample_bilinear(apply_conv(m['outconv2'], hd2), 2)
    d1 = apply_conv(m['outconv1'], hd1)

    to_nchw_f32 = lambda t: jnp.transpose(t.astype(jnp.float32), (0, 3, 1, 2))
    return tuple(to_nchw_f32(t) for t in (d1, d2, d3, d4, fedge))


if __name__ == "__main__":
    key = jax.random.PRNGKey(0)
    # small test shape consistent with the module: N=2, C=3, H=W=16
    x = jax.random.normal(key, (2, 3, 16, 16), jnp.float32)

    pg = ParamGen(seed=0)
    model = build_model(pg, n_channels=3)

    outs = forward(model, x)
    outs = jax.block_until_ready(outs)

    expected = [(2, 1, 16, 16)] * 5
    assert [tuple(o.shape) for o in outs] == expected, \
        [tuple(o.shape) for o in outs]
    assert all(bool(jnp.all(jnp.isfinite(o))) for o in outs)
    print("KERNEL_OK")
</pallas_src>

<mosaic_0001>
module attributes {stable_mosaic.version = 11 : i64} {
  func.func @_mm_kernel(%arg0: i32, %arg1: i32, %arg2: i32, %arg3: memref<256x27xbf16, #tpu.memory_space<vmem>>, %arg4: memref<27x128xbf16, #tpu.memory_space<vmem>>, %arg5: memref<1x128xf32, #tpu.memory_space<vmem>>, %arg6: memref<256x128xbf16, #tpu.memory_space<vmem>>, %arg7: memref<256x128xf32, #tpu.memory_space<vmem>>) attributes {dimension_semantics = [#tpu.dimension_semantics<parallel>, #tpu.dimension_semantics<parallel>, #tpu.dimension_semantics<arbitrary>], iteration_bounds = array<i64: 2, 1, 1>, scalar_prefetch = 0 : i64, scratch_operands = 1 : i64, tpu.core_type = #tpu.core_type<tc>, window_params = [{transform_indices = @transform_0, window_bounds = array<i64: 256, 27>}, {transform_indices = @transform_1, window_bounds = array<i64: 27, 128>}, {transform_indices = @transform_2, window_bounds = array<i64: 1, 128>}, {transform_indices = @transform_3, window_bounds = array<i64: 256, 128>}]} {
    %c0_i32 = arith.constant 0 : i32
    %0 = arith.cmpi eq, %arg2, %c0_i32 : i32
    %1 = arith.extui %0 : i1 to i32
    %c0_i32_0 = arith.constant 0 : i32
    %2 = arith.cmpi ne, %1, %c0_i32_0 : i32
    scf.if %2 {
      %cst_10 = arith.constant 0.000000e+00 : f32
      %12 = vector.broadcast %cst_10 : f32 to vector<256x128xf32>
      %c0_11 = arith.constant 0 : index
      %c0_12 = arith.constant 0 : index
      %13 = vector.load %arg7[%c0_11, %c0_12] : memref<256x128xf32, #tpu.memory_space<vmem>>, vector<256x128xf32>
      tpu.vector_store %arg7[%c0_11, %c0_12], %12 {strides = array<i32>} : memref<256x128xf32, #tpu.memory_space<vmem>>, vector<256x128xf32>,
    } else {
    }
    %c0 = arith.constant 0 : index
    %c0_1 = arith.constant 0 : index
    %3 = vector.load %arg7[%c0, %c0_1] : memref<256x128xf32, #tpu.memory_space<vmem>>, vector<256x128xf32>
    %c0_2 = arith.constant 0 : index
    %c0_3 = arith.constant 0 : index
    %4 = vector.load %arg3[%c0_2, %c0_3] : memref<256x27xbf16, #tpu.memory_space<vmem>>, vector<256x27xbf16>
    %c0_4 = arith.constant 0 : index
    %c0_5 = arith.constant 0 : index
    %5 = vector.load %arg4[%c0_4, %c0_5] : memref<27x128xbf16, #tpu.memory_space<vmem>>, vector<27x128xbf16>
    %cst = arith.constant dense<0.000000e+00> : vector<256x128xf32>
    %6 = tpu.matmul %4, %5, %cst {dimension_numbers = #tpu.dot_dimension_numbers<[1], [0], [0], [1], [0, 0, 1, 1], [], []>} : vector<256x27xbf16>, vector<27x128xbf16>, vector<256x128xf32> -> vector<256x128xf32>
    %7 = arith.addf %3, %6 : vector<256x128xf32>
    %c0_6 = arith.constant 0 : index
    %c0_7 = arith.constant 0 : index
    %8 = vector.load %arg7[%c0_6, %c0_7] : memref<256x128xf32, #tpu.memory_space<vmem>>, vector<256x128xf32>
    tpu.vector_store %arg7[%c0_6, %c0_7], %7 {strides = array<i32>} : memref<256x128xf32, #tpu.memory_space<vmem>>, vector<256x128xf32>,
    %c0_i32_8 = arith.constant 0 : i32
    %9 = arith.cmpi eq, %arg2, %c0_i32_8 : i32
    %10 = arith.extui %9 : i1 to i32
    %c0_i32_9 = arith.constant 0 : i32
    %11 = arith.cmpi ne, %10, %c0_i32_9 : i32
    scf.if %11 {
      %c0_10 = arith.constant 0 : index
      %c0_11 = arith.constant 0 : index
      %12 = vector.load %arg7[%c0_10, %c0_11] : memref<256x128xf32, #tpu.memory_space<vmem>>, vector<256x128xf32>
      %c0_12 = arith.constant 0 : index
      %c0_13 = arith.constant 0 : index
      %13 = vector.load %arg5[%c0_12, %c0_13] : memref<1x128xf32, #tpu.memory_space<vmem>>, vector<1x128xf32>
      %14 = vector.broadcast %13 : vector<1x128xf32> to vector<256x128xf32>
      %15 = arith.addf %12, %14 : vector<256x128xf32>
      %cst_14 = arith.constant 0.000000e+00 : f32
      %16 = vector.broadcast %cst_14 : f32 to vector<256x128xf32>
      %17 = arith.maximumf %15, %16 : vector<256x128xf32>
      %18 = arith.truncf %17 : vector<256x128xf32> to vector<256x128xbf16>
      %c0_15 = arith.constant 0 : index
      %c0_16 = arith.constant 0 : index
      %19 = vector.load %arg6[%c0_15, %c0_16] : memref<256x128xbf16, #tpu.memory_space<vmem>>, vector<256x128xbf16>
      tpu.vector_store %arg6[%c0_15, %c0_16], %18 {strides = array<i32>} : memref<256x128xbf16, #tpu.memory_space<vmem>>, vector<256x128xbf16>,
    } else {
    }
    return
  }
  func.func @transform_0(%arg0: i32, %arg1: i32, %arg2: i32) -> (i32, i32) {
    %c0_i32 = arith.constant 0 : i32
    return %arg0, %arg2 : i32, i32
  }
  func.func @transform_1(%arg0: i32, %arg1: i32, %arg2: i32) -> (i32, i32) {
    %c0_i32 = arith.constant 0 : i32
    return %arg2, %arg1 : i32, i32
  }
  func.func @transform_2(%arg0: i32, %arg1: i32, %arg2: i32) -> (i32, i32) {
    %c0_i32 = arith.constant 0 : i32
    %c0_i32_0 = arith.constant 0 : i32
    return %c0_i32, %arg1 : i32, i32
  }
  func.func @transform_3(%arg0: i32, %arg1: i32, %arg2: i32) -> (i32, i32) {
    %c0_i32 = arith.constant 0 : i32
    return %arg0, %arg1 : i32, i32
  }
}

</mosaic_0001>

<llo_original>
// kernel: tpu_custom_call.1
$region0: #{tpu_custom_call.1}
  #allocation0 [shape = 'u32[]', space=smem, size = 0x4, offset = 0x4, fixed_abs, tag = 'smem constant byte address 0x4 - core index']
  #allocation1 [shape = 'u32[72,128]{1,0:T(1,128)}', space=vmem, size = 0x9000, scoped, tag = 'internal scratch']
  #allocation2 [shape = 'f32[256,128]{1,0:T(8,128)}', space=vmem, size = 0x20000, scoped, tag = 'scratch operand']
  %s0 = inlined_call_operand.vmem [shape: bf16[512,27], index: 0, kind: input, shape index: {}]
  %s1 = inlined_call_operand.vmem [shape: bf16[27,128], index: 1, kind: input, shape index: {}]
  %s2 = inlined_call_operand.vmem [shape: f32[1,128], index: 2, kind: input, shape index: {}]
  %s3 = inlined_call_operand.hbm [shape: bf16[512,128], index: 3, kind: output, shape index: {}]
  %s4 = sld [smem:[#allocation0]]
  $region53: #{tpu_custom_call.1} parent=0
    _
  %s6 = ssub.s32 1, %s4
  %s7 = scalar_select 0, %s6, %s4
  $region1: #{tpu_custom_call.1} parent=0
    #allocation3 [shape = 'u8[131072]{0}', space=vmem, size = 0x20000, scoped, tag = 'output window, operand 0']
    #allocation4 [shape = 's32[2]{0}', space=sflag, size = 0x8, scoped, tag = 'scoped memory for tpu_custom_call.1']
    %8 = vsyncpa [#allocation4], 0
    %s9 = scalar_lea.sflag [#allocation4], 1
    %10 = vsyncpa %s9, 0
    loop: start=0, step=1, limit=4
    $region2: #{tpu_custom_call.1} parent=1 // loop_pre_header
      _
    $region3: #{tpu_custom_call.1} parent=1 // loop_header
      %s12 = sphi 0, %s16
      %p13 = scmp.ge.s32.totalorder %s12, 4
      %s19 = sphi 0, %s38
      %s20 = sphi 0, %s34
      %s21 = sphi 0, %s30
      %s22 = sphi 0, %s19
      %s23 = sphi 0, %s20
      %s24 = sphi 0, %s21
      %s25 = sphi 0, %s22
      %s26 = sphi 0, %s23
      %s27 = sphi 0, %s24
      %s43 = sphi 0, %s45
      %s46 = sphi 0, %s43
      %s47 = sphi 0, %s46
      %s63 = sphi 0, %s47
      %s71 = sphi 0, %s73
      %s74 = sphi 0, %s71
      %s75 = sphi 0, %s74
      %s91 = sphi 0, %s75
      %s97 = sphi 0, %s99
      %s100 = sphi 0, %s97
      %s101 = sphi 0, %s100
      %s117 = sphi 0, %s101
      %s125 = sphi 0, %s127
      %s128 = sphi 0, %s125
      %s129 = sphi 0, %s128
      %s145 = sphi 0, %s129
    $region4: #{tpu_custom_call.1} parent=1 // loop_header_branch
      %15 = sbr.rel (%p13) target = $region8
    $region5: #{tpu_custom_call.1} parent=1 // loop_body
      %s17 = ssub.s32 %s12, 1
      %s18 = ssub.s32 %s12, 2
      %s28 = sadd.s32 1, %s21
      %p29 = scmp.ge.s32.totalorder %s28, 1
      %s30 = scalar_select %p29, 0, %s28
      %s31 = sadd.s32 1, %s20
      %s32 = scalar_select %p29, %s31, %s20
      %p33 = scmp.ge.s32.totalorder %s32, 1
      %s34 = scalar_select %p33, 0, %s32
      %s35 = sadd.s32 1, %s19
      %s36 = scalar_select %p33, %s35, %s19
      %p37 = scmp.ge.s32.totalorder %s36, 2
      %s38 = scalar_select %p37, 0, %s36
      %s39 = ssub.s32 %s19, %s38
      %s40 = ssub.s32 %s21, %s30
      %s41 = sor.u32 %s39, %s40
      %p42 = scmp.eq.s32.totalorder %s41, 0
      %s44 = sadd.s32 %s43, 1
      %s45 = scalar_select %p42, %s43, %s44
      %p48 = pneg %p42
      %p49 = scmp.eq.s32.totalorder %s12, 1
      %p50 = por %p48, %p49
      %p51 = scmp.ne.s32.totalorder %s43, %s46
      %p52 = scmp.eq.s32.totalorder %s12, 0
      %p53 = por %p51, %p52
      %p54 = scmp.ne.s32.totalorder %s43, %s46
      %p55 = scmp.eq.s32.totalorder %s17, 1
      %p56 = por %p54, %p55
      %p57 = scmp.ne.s32.totalorder %s46, %s47
      %p58 = scmp.eq.s32.totalorder %s17, 0
      %p59 = por %p57, %p58
      %p60 = scmp.ne.s32.totalorder %s46, %s47
      %p61 = scmp.eq.s32.totalorder %s18, 1
      %p62 = por %p60, %p61
      %p64 = scmp.ne.s32.totalorder %s47, %s63
      %p65 = scmp.eq.s32.totalorder %s18, 0
      %p66 = por %p64, %p65
      %s67 = ssub.s32 %s21, %s30
      %s68 = ssub.s32 %s20, %s34
      %s69 = sor.u32 %s67, %s68
      %p70 = scmp.eq.s32.totalorder %s69, 0
      %s72 = sadd.s32 %s71, 1
      %s73 = scalar_select %p70, %s71, %s72
      %p76 = pneg %p70
      %p77 = scmp.eq.s32.totalorder %s12, 1
      %p78 = por %p76, %p77
      %p79 = scmp.ne.s32.totalorder %s71, %s74
      %p80 = scmp.eq.s32.totalorder %s12, 0
      %p81 = por %p79, %p80
      %p82 = scmp.ne.s32.totalorder %s71, %s74
      %p83 = scmp.eq.s32.totalorder %s17, 1
      %p84 = por %p82, %p83
      %p85 = scmp.ne.s32.totalorder %s74, %s75
      %p86 = scmp.eq.s32.totalorder %s17, 0
      %p87 = por %p85, %p86
      %p88 = scmp.ne.s32.totalorder %s74, %s75
      %p89 = scmp.eq.s32.totalorder %s18, 1
      %p90 = por %p88, %p89
      %p92 = scmp.ne.s32.totalorder %s75, %s91
      %p93 = scmp.eq.s32.totalorder %s18, 0
      %p94 = por %p92, %p93
      %s95 = ssub.s32 %s20, %s34
      %p96 = scmp.eq.s32.totalorder %s95, 0
      %s98 = sadd.s32 %s97, 1
      %s99 = scalar_select %p96, %s97, %s98
      %p102 = pneg %p96
      %p103 = scmp.eq.s32.totalorder %s12, 1
      %p104 = por %p102, %p103
      %p105 = scmp.ne.s32.totalorder %s97, %s100
      %p106 = scmp.eq.s32.totalorder %s12, 0
      %p107 = por %p105, %p106
      %p108 = scmp.ne.s32.totalorder %s97, %s100
      %p109 = scmp.eq.s32.totalorder %s17, 1
      %p110 = por %p108, %p109
      %p111 = scmp.ne.s32.totalorder %s100, %s101
      %p112 = scmp.eq.s32.totalorder %s17, 0
      %p113 = por %p111, %p112
      %p114 = scmp.ne.s32.totalorder %s100, %s101
      %p115 = scmp.eq.s32.totalorder %s18, 1
      %p116 = por %p114, %p115
      %p118 = scmp.ne.s32.totalorder %s101, %s117
      %p119 = scmp.eq.s32.totalorder %s18, 0
      %p120 = por %p118, %p119
      %s121 = ssub.s32 %s19, %s38
      %s122 = ssub.s32 %s20, %s34
      %s123 = sor.u32 %s121, %s122
      %p124 = scmp.eq.s32.totalorder %s123, 0
      %s126 = sadd.s32 %s125, 1
      %s127 = scalar_select %p124, %s125, %s126
      %p130 = pneg %p124
      %p131 = scmp.eq.s32.totalorder %s12, 1
      %p132 = por %p130, %p131
      %p133 = scmp.ne.s32.totalorder %s125, %s128
      %p134 = scmp.eq.s32.totalorder %s12, 0
      %p135 = por %p133, %p134
      %p136 = scmp.ne.s32.totalorder %s125, %s128
      %p137 = scmp.eq.s32.totalorder %s17, 1
      %p138 = por %p136, %p137
      %p139 = scmp.ne.s32.totalorder %s128, %s129
      %p140 = scmp.eq.s32.totalorder %s17, 0
      %p141 = por %p139, %p140
      %p142 = scmp.ne.s32.totalorder %s128, %s129
      %p143 = scmp.eq.s32.totalorder %s18, 1
      %p144 = por %p142, %p143
      %p146 = scmp.ne.s32.totalorder %s129, %s145
      %p147 = scmp.eq.s32.totalorder %s18, 0
      %p148 = por %p146, %p147
      %p149 = scmp.le.s32.totalorder 1, %s12
      %p150 = scmp.lt.s32.totalorder %s12, 3
      %p151 = pnand %p149, %p150
      %p152 = pneg %p151
      // Predicated region
      $region9: #{tpu_custom_call.1} parent=5 // pred_check
        _
      $region10: #{tpu_custom_call.1} parent=5 // pred_check_branch
        %154 = sbr.rel (%p151) target = $region12
      $region11: #{tpu_custom_call.1} parent=5 // pred_region
        %s155 = ssub.s32 %s12, 1
        // Predicated region
        $region13: #{tpu_custom_call.1} parent=11 // pred_check
          %p156 = pneg %p87
        $region14: #{tpu_custom_call.1} parent=11 // pred_check_branch
          %158 = sbr.rel (%p156) target = $region16
        $region15: #{tpu_custom_call.1} parent=11 // pred_region
          %s159 = smul.u32 4, %s24
          %p160 = scmp.lt.s32.totalorder %s159, 3
          %s161 = scalar_select %p160, %s159, 3
          %p162 = scmp.lt.s32.totalorder %s23, 0
          %s163 = scalar_select %p162, %s23, 0
          %s164 = sadd.s32 %s163, %s161
          %s165 = smul.addr %s164, 4
          %s166 = scalar_lea.vmem %s1, %s165
          %s167 = smul.u32 4, %s24
        $region16: #{tpu_custom_call.1} parent=11 // pred_fallthru
          _
        // Predicated region
        $region17: #{tpu_custom_call.1} parent=11 // pred_check
          %p168 = pneg %p113
        $region18: #{tpu_custom_call.1} parent=11 // pred_check_branch
          %170 = sbr.rel (%p168) target = $region20
        $region19: #{tpu_custom_call.1} parent=11 // pred_region
          %p171 = scmp.lt.s32.totalorder %s23, 0
          %s172 = scalar_select %p171, %s23, 0
          %s173 = scalar_lea.vmem %s2, %s172
        $region20: #{tpu_custom_call.1} parent=11 // pred_fallthru
          _
      $region12: #{tpu_custom_call.1} parent=5 // pred_fallthru
        _
      %p174 = scmp.lt.s32.totalorder %s12, 2
      // Predicated region
      $region21: #{tpu_custom_call.1} parent=5 // pred_check
        %p175 = pneg %p174
      $region22: #{tpu_custom_call.1} parent=5 // pred_check_branch
        %177 = sbr.rel (%p175) target = $region24
      $region23: #{tpu_custom_call.1} parent=5 // pred_region
        // Predicated region
        $region25: #{tpu_custom_call.1} parent=23 // pred_check
          %p178 = pneg %p53
        $region26: #{tpu_custom_call.1} parent=23 // pred_check_branch
          %180 = sbr.rel (%p178) target = $region28
        $region27: #{tpu_custom_call.1} parent=23 // pred_region
          %s181 = smul.u32 32, %s19
          %p182 = scmp.lt.s32.totalorder %s181, 63
          %s183 = scalar_select %p182, %s181, 63
          %p184 = scmp.lt.s32.totalorder %s21, 0
          %s185 = scalar_select %p184, %s21, 0
          %s186 = sadd.s32 %s185, %s183
          %s187 = smul.addr %s186, 4
          %s188 = scalar_lea.vmem %s0, %s187
          %s189 = smul.u32 32, %s19
        $region28: #{tpu_custom_call.1} parent=23 // pred_fallthru
          _
      $region24: #{tpu_custom_call.1} parent=5 // pred_fallthru
        _
      %p190 = scmp.le.s32.totalorder 1, %s12
      %p191 = scmp.lt.s32.totalorder %s12, 3
      %p192 = pnand %p190, %p191
      %p193 = pneg %p192
      // Predicated region
      $region29: #{tpu_custom_call.1} parent=5 // pred_check
        _
      $region30: #{tpu_custom_call.1} parent=5 // pred_check_branch
        %195 = sbr.rel (%p192) target = $region32
      $region31: #{tpu_custom_call.1} parent=5 // pred_region
        %s196 = ssub.s32 %s12, 1
        %s197 = smul.u32 32, %s22
        %p198 = scmp.lt.s32.totalorder %s197, 63
        %s199 = scalar_select %p198, %s197, 63
        %p200 = scmp.lt.s32.totalorder %s24, 0
        %s201 = scalar_select %p200, %s24, 0
        %s202 = sadd.s32 %s201, %s199
        %s203 = smul.addr %s202, 4
        %s204 = scalar_lea.vmem %s0, %s203
        %p205 = pneg %p59
        %p206 = pneg %p56
        %s207 = smul.u32 4, %s24
        %p208 = scmp.lt.s32.totalorder %s207, 3
        %s209 = scalar_select %p208, %s207, 3
        %p210 = scmp.lt.s32.totalorder %s23, 0
        %s211 = scalar_select %p210, %s23, 0
        %s212 = sadd.s32 %s211, %s209
        %s213 = smul.addr %s212, 4
        %s214 = scalar_lea.vmem %s1, %s213
        %p215 = pneg %p87
        %p216 = pneg %p84
        %p217 = scmp.lt.s32.totalorder %s23, 0
        %s218 = scalar_select %p217, %s23, 0
        %s219 = scalar_lea.vmem %s2, %s218
        %p220 = pneg %p113
        %p221 = pneg %p110
        %p222 = pneg %p141
        %p223 = pneg %p138
        %s224 = sand.u32 %s128, 1
        %s225 = scalar_lea.sflag [#allocation4], %s224
        %s226 = sand.u32 %s128, 1
        %s227 = smul.addr %s226, 128
        %s228 = scalar_lea.vmem [#allocation3], %s227
        %s229 = smul.u32 32, %s22
        %p230 = scmp.lt.s32.totalorder %s229, 63
        %s231 = scalar_select %p230, %s229, 63
        %p232 = scmp.lt.s32.totalorder %s24, 0
        %s233 = scalar_select %p232, %s24, 0
        %s234 = sadd.s32 %s233, %s231
        %s235 = smul.addr %s234, 4
        %s236 = scalar_lea.vmem %s0, %s235
        %s237 = smul.u32 32, %s22
        %s238 = smul.u32 4, %s24
        %p239 = scmp.lt.s32.totalorder %s238, 3
        %s240 = scalar_select %p239, %s238, 3
        %p241 = scmp.lt.s32.totalorder %s23, 0
        %s242 = scalar_select %p241, %s23, 0
        %s243 = sadd.s32 %s242, %s240
        %s244 = smul.addr %s243, 4
        %s245 = scalar_lea.vmem %s1, %s244
        %s246 = smul.u32 4, %s24
        %p247 = scmp.lt.s32.totalorder %s23, 0
        %s248 = scalar_select %p247, %s23, 0
        %s249 = scalar_lea.vmem %s2, %s248
        %s250 = smul.u32 32, %s22
        %p252 = scmp.eq.s32.totalorder %s24, 0
        // Predicated region
        $region33: #{tpu_custom_call.1} parent=31 // pred_check
          %p253 = pneg %p252
        $region34: #{tpu_custom_call.1} parent=31 // pred_check_branch
          %255 = sbr.rel (%p253) target = $region36
        $region35: #{tpu_custom_call.1} parent=31 // pred_region
          %256 = vst [vmem:[#allocation2] sm:$0xff] 0.0
          %257 = vst [vmem:[#allocation2 + $0x8] sm:$0xff] 0.0
          %258 = vst [vmem:[#allocation2 + $0x10] sm:$0xff] 0.0
          %259 = vst [vmem:[#allocation2 + $0x18] sm:$0xff] 0.0
          %260 = vst [vmem:[#allocation2 + $0x20] sm:$0xff] 0.0
          %261 = vst [vmem:[#allocation2 + $0x28] sm:$0xff] 0.0
          %262 = vst [vmem:[#allocation2 + $0x30] sm:$0xff] 0.0
          %263 = vst [vmem:[#allocation2 + $0x38] sm:$0xff] 0.0
          %264 = vst [vmem:[#allocation2 + $0x40] sm:$0xff] 0.0
          %265 = vst [vmem:[#allocation2 + $0x48] sm:$0xff] 0.0
          %266 = vst [vmem:[#allocation2 + $0x50] sm:$0xff] 0.0
          %267 = vst [vmem:[#allocation2 + $0x58] sm:$0xff] 0.0
          %268 = vst [vmem:[#allocation2 + $0x60] sm:$0xff] 0.0
          %269 = vst [vmem:[#allocation2 + $0x68] sm:$0xff] 0.0
          %270 = vst [vmem:[#allocation2 + $0x70] sm:$0xff] 0.0
          %271 = vst [vmem:[#allocation2 + $0x78] sm:$0xff] 0.0
          %272 = vst [vmem:[#allocation2 + $0x80] sm:$0xff] 0.0
          %273 = vst [vmem:[#allocation2 + $0x88] sm:$0xff] 0.0
          %274 = vst [vmem:[#allocation2 + $0x90] sm:$0xff] 0.0
          %275 = vst [vmem:[#allocation2 + $0x98] sm:$0xff] 0.0
          %276 = vst [vmem:[#allocation2 + $0xa0] sm:$0xff] 0.0
          %277 = vst [vmem:[#allocation2 + $0xa8] sm:$0xff] 0.0
          %278 = vst [vmem:[#allocation2 + $0xb0] sm:$0xff] 0.0
          %279 = vst [vmem:[#allocation2 + $0xb8] sm:$0xff] 0.0
          %280 = vst [vmem:[#allocation2 + $0xc0] sm:$0xff] 0.0
          %281 = vst [vmem:[#allocation2 + $0xc8] sm:$0xff] 0.0
          %282 = vst [vmem:[#allocation2 + $0xd0] sm:$0xff] 0.0
          %283 = vst [vmem:[#allocation2 + $0xd8] sm:$0xff] 0.0
          %284 = vst [vmem:[#allocation2 + $0xe0] sm:$0xff] 0.0
          %285 = vst [vmem:[#allocation2 + $0xe8] sm:$0xff] 0.0
          %286 = vst [vmem:[#allocation2 + $0xf0] sm:$0xff] 0.0
          %287 = vst [vmem:[#allocation2 + $0xf8] sm:$0xff] 0.0
        $region36: #{tpu_custom_call.1} parent=31 // pred_fallthru
          _
        %v288 = vld [vmem:[#allocation2] sm:$0xff]
        %v289 = vld [vmem:[#allocation2 + $0x8] sm:$0xff]
        %v290 = vld [vmem:[#allocation2 + $0x10] sm:$0xff]
        %v291 = vld [vmem:[#allocation2 + $0x18] sm:$0xff]
        %v292 = vld [vmem:[#allocation2 + $0x20] sm:$0xff]
        %v293 = vld [vmem:[#allocation2 + $0x28] sm:$0xff]
        %v294 = vld [vmem:[#allocation2 + $0x30] sm:$0xff]
        %v295 = vld [vmem:[#allocation2 + $0x38] sm:$0xff]
        %v296 = vld [vmem:[#allocation2 + $0x40] sm:$0xff]
        %v297 = vld [vmem:[#allocation2 + $0x48] sm:$0xff]
        %v298 = vld [vmem:[#allocation2 + $0x50] sm:$0xff]
        %v299 = vld [vmem:[#allocation2 + $0x58] sm:$0xff]
        %v300 = vld [vmem:[#allocation2 + $0x60] sm:$0xff]
        %v301 = vld [vmem:[#allocation2 + $0x68] sm:$0xff]
        %v302 = vld [vmem:[#allocation2 + $0x70] sm:$0xff]
        %v303 = vld [vmem:[#allocation2 + $0x78] sm:$0xff]
        %v304 = vld [vmem:[#allocation2 + $0x80] sm:$0xff]
        %v305 = vld [vmem:[#allocation2 + $0x88] sm:$0xff]
        %v306 = vld [vmem:[#allocation2 + $0x90] sm:$0xff]
        %v307 = vld [vmem:[#allocation2 + $0x98] sm:$0xff]
        %v308 = vld [vmem:[#allocation2 + $0xa0] sm:$0xff]
        %v309 = vld [vmem:[#allocation2 + $0xa8] sm:$0xff]
        %v310 = vld [vmem:[#allocation2 + $0xb0] sm:$0xff]
        %v311 = vld [vmem:[#allocation2 + $0xb8] sm:$0xff]
        %v312 = vld [vmem:[#allocation2 + $0xc0] sm:$0xff]
        %v313 = vld [vmem:[#allocation2 + $0xc8] sm:$0xff]
        %v314 = vld [vmem:[#allocation2 + $0xd0] sm:$0xff]
        %v315 = vld [vmem:[#allocation2 + $0xd8] sm:$0xff]
        %v316 = vld [vmem:[#allocation2 + $0xe0] sm:$0xff]
        %v317 = vld [vmem:[#allocation2 + $0xe8] sm:$0xff]
        %v318 = vld [vmem:[#allocation2 + $0xf0] sm:$0xff]
        %v319 = vld [vmem:[#allocation2 + $0xf8] sm:$0xff]
        %v320 = vld [vmem:[%s236] sm:$0xf]
        %v321 = vld [vmem:[%s236 + $0x4] sm:$0xf]
        %v322 = vld [vmem:[%s236 + $0x8] sm:$0xf]
        %v323 = vld [vmem:[%s236 + $0xc] sm:$0xf]
        %v324 = vld [vmem:[%s236 + $0x10] sm:$0xf]
        %v325 = vld [vmem:[%s236 + $0x14] sm:$0xf]
        %v326 = vld [vmem:[%s236 + $0x18] sm:$0xf]
        %v327 = vld [vmem:[%s236 + $0x1c] sm:$0xf]
        %v328 = vld [vmem:[%s236 + $0x20] sm:$0xf]
        %v329 = vld [vmem:[%s236 + $0x24] sm:$0xf]
        %v330 = vld [vmem:[%s236 + $0x28] sm:$0xf]
        %v331 = vld [vmem:[%s236 + $0x2c] sm:$0xf]
        %v332 = vld [vmem:[%s236 + $0x30] sm:$0xf]
        %v333 = vld [vmem:[%s236 + $0x34] sm:$0xf]
        %v334 = vld [vmem:[%s236 + $0x38] sm:$0xf]
        %v335 = vld [vmem:[%s236 + $0x3c] sm:$0xf]
        %v336 = vld [vmem:[%s236 + $0x40] sm:$0xf]
        %v337 = vld [vmem:[%s236 + $0x44] sm:$0xf]
        %v338 = vld [vmem:[%s236 + $0x48] sm:$0xf]
        %v339 = vld [vmem:[%s236 + $0x4c] sm:$0xf]
        %v340 = vld [vmem:[%s236 + $0x50] sm:$0xf]
        %v341 = vld [vmem:[%s236 + $0x54] sm:$0xf]
        %v342 = vld [vmem:[%s236 + $0x58] sm:$0xf]
        %v343 = vld [vmem:[%s236 + $0x5c] sm:$0xf]
        %v344 = vld [vmem:[%s236 + $0x60] sm:$0xf]
        %v345 = vld [vmem:[%s236 + $0x64] sm:$0xf]
        %v346 = vld [vmem:[%s236 + $0x68] sm:$0xf]
        %v347 = vld [vmem:[%s236 + $0x6c] sm:$0xf]
        %v348 = vld [vmem:[%s236 + $0x70] sm:$0xf]
        %v349 = vld [vmem:[%s236 + $0x74] sm:$0xf]
        %v350 = vld [vmem:[%s236 + $0x78] sm:$0xf]
        %v351 = vld [vmem:[%s236 + $0x7c] sm:$0xf]
        %v352 = vld [vmem:[%s245] sm:$0xf]
        %v353 = vld [vmem:[%s245 + $0x4] sm:$0xf]
        %v354 = vld [vmem:[%s245 + $0x8] sm:$0xf]
        %v355 = vld [vmem:[%s245 + $0xc] sm:$0x3]
        %v388 = vunpack.c.l.b16 %v320
        %v389 = vunpack.c.l.b16 %v321
        %v390 = vunpack.c.l.b16 %v322
        %v391 = vunpack.c.l.b16 %v323
        %v392 = vunpack.c.l.b16 %v324
        %v393 = vunpack.c.l.b16 %v325
        %v394 = vunpack.c.l.b16 %v326
        %v395 = vunpack.c.l.b16 %v327
        %v396 = vunpack.c.l.b16 %v328
        %v397 = vunpack.c.l.b16 %v329
        %v398 = vunpack.c.l.b16 %v330
        %v399 = vunpack.c.l.b16 %v331
        %v400 = vunpack.c.l.b16 %v332
        %v401 = vunpack.c.l.b16 %v333
        %v402 = vunpack.c.l.b16 %v334
        %v403 = vunpack.c.l.b16 %v335
        %v404 = vunpack.c.l.b16 %v336
        %v405 = vunpack.c.l.b16 %v337
        %v406 = vunpack.c.l.b16 %v338
        %v407 = vunpack.c.l.b16 %v339
        %v408 = vunpack.c.l.b16 %v340
        %v409 = vunpack.c.l.b16 %v341
        %v410 = vunpack.c.l.b16 %v342
        %v411 = vunpack.c.l.b16 %v343
        %v412 = vunpack.c.l.b16 %v344
        %v413 = vunpack.c.l.b16 %v345
        %v414 = vunpack.c.l.b16 %v346
        %v415 = vunpack.c.l.b16 %v347
        %v416 = vunpack.c.l.b16 %v348
        %v417 = vunpack.c.l.b16 %v349
        %v418 = vunpack.c.l.b16 %v350
        %v419 = vunpack.c.l.b16 %v351
        %v420 = vpack.c.b16 %v389, %v388
        %v421 = vpack.c.b16 %v391, %v390
        %v422 = vpack.c.b16 %v393, %v392
        %v423 = vpack.c.b16 %v395, %v394
        %v424 = vpack.c.b16 %v397, %v396
        %v425 = vpack.c.b16 %v399, %v398
        %v426 = vpack.c.b16 %v401, %v400
        %v427 = vpack.c.b16 %v403, %v402
        %v428 = vpack.c.b16 %v405, %v404
        %v429 = vpack.c.b16 %v407, %v406
        %v430 = vpack.c.b16 %v409, %v408
        %v431 = vpack.c.b16 %v411, %v410
        %v432 = vpack.c.b16 %v413, %v412
        %v433 = vpack.c.b16 %v415, %v414
        %v434 = vpack.c.b16 %v417, %v416
        %v435 = vpack.c.b16 %v419, %v418
        %v440 = vunpack.c.l.b16 %v352
        %v441 = vunpack.c.l.b16 %v353
        %v442 = vunpack.c.l.b16 %v354
        %v443 = vunpack.c.l.b16 %v355
        %v444 = vpack.c.b16 %v441, %v440
        %v445 = vpack.c.b16 %v443, %v442
        %vm447 = vcmask 220160
        %v449 = vsel %vm447, %v420, 0
        %v452 = vsel %vm447, %v421, 0
        %v455 = vsel %vm447, %v422, 0
        %v458 = vsel %vm447, %v423, 0
        %v461 = vsel %vm447, %v424, 0
        %v464 = vsel %vm447, %v425, 0
        %v467 = vsel %vm447, %v426, 0
        %v470 = vsel %vm447, %v427, 0
        %v473 = vsel %vm447, %v428, 0
        %v476 = vsel %vm447, %v429, 0
        %v479 = vsel %vm447, %v430, 0
        %v482 = vsel %vm447, %v431, 0
        %v485 = vsel %vm447, %v432, 0
        %v488 = vsel %vm447, %v433, 0
        %v491 = vsel %vm447, %v434, 0
        %v494 = vsel %vm447, %v435, 0
        %vm496 = vcmask 1044480
        %vm497 = vcmask 1045504
        %v498 = vsel %vm496, 4294967295, 65535
        %v499 = vsel %vm497, %v498, 0
        %v501 = vand.u32 %v445, %v499
        %503 = vmatpush.bf16.msra.mxu0 0
        %504 = vmatpush.bf16.msra.mxu0 0
        %505 = vmatpush.bf16.msra.mxu0 0
        %506 = vmatpush.bf16.msra.mxu0 0
        %507 = vmatpush.bf16.msra.mxu0 0
        %508 = vmatpush.bf16.msra.mxu0 0
        %509 = vmatpush.bf16.msra.mxu0 %v501
        %510 = vmatpush.bf16.msra.mxu0 %v444
        %511 = vmatmul.bf16.gmra.mxu0 %v449
        %v512 = vpop.f32.mrf.mxu0
        %v513 = vadd.f32 0.0, %v512
        %v514 = vpop.f32.mrf.mxu0
        %v515 = vadd.f32 0.0, %v514
        %516 = vmatmul.bf16.gmra.mxu0 %v452
        %v517 = vpop.f32.mrf.mxu0
        %v518 = vadd.f32 0.0, %v517
        %v519 = vpop.f32.mrf.mxu0
        %v520 = vadd.f32 0.0, %v519
        %521 = vmatmul.bf16.gmra.mxu0 %v455
        %v522 = vpop.f32.mrf.mxu0
        %v523 = vadd.f32 0.0, %v522
        %v524 = vpop.f32.mrf.mxu0
        %v525 = vadd.f32 0.0, %v524
        %526 = vmatmul.bf16.gmra.mxu0 %v458
        %v527 = vpop.f32.mrf.mxu0
        %v528 = vadd.f32 0.0, %v527
        %v529 = vpop.f32.mrf.mxu0
        %v530 = vadd.f32 0.0, %v529
        %531 = vmatmul.bf16.gmra.mxu0 %v461
        %v532 = vpop.f32.mrf.mxu0
        %v533 = vadd.f32 0.0, %v532
        %v534 = vpop.f32.mrf.mxu0
        %v535 = vadd.f32 0.0, %v534
        %536 = vmatmul.bf16.gmra.mxu0 %v464
        %v537 = vpop.f32.mrf.mxu0
        %v538 = vadd.f32 0.0, %v537
        %v539 = vpop.f32.mrf.mxu0
        %v540 = vadd.f32 0.0, %v539
        %541 = vmatmul.bf16.gmra.mxu0 %v467
        %v542 = vpop.f32.mrf.mxu0
        %v543 = vadd.f32 0.0, %v542
        %v544 = vpop.f32.mrf.mxu0
        %v545 = vadd.f32 0.0, %v544
        %546 = vmatmul.bf16.gmra.mxu0 %v470
        %v547 = vpop.f32.mrf.mxu0
        %v548 = vadd.f32 0.0, %v547
        %v549 = vpop.f32.mrf.mxu0
        %v550 = vadd.f32 0.0, %v549
        %551 = vmatmul.bf16.gmra.mxu0 %v473
        %v552 = vpop.f32.mrf.mxu0
        %v553 = vadd.f32 0.0, %v552
        %v554 = vpop.f32.mrf.mxu0
        %v555 = vadd.f32 0.0, %v554
        %556 = vmatmul.bf16.gmra.mxu0 %v476
        %v557 = vpop.f32.mrf.mxu0
        %v558 = vadd.f32 0.0, %v557
        %v559 = vpop.f32.mrf.mxu0
        %v560 = vadd.f32 0.0, %v559
        %561 = vmatmul.bf16.gmra.mxu0 %v479
        %v562 = vpop.f32.mrf.mxu0
        %v563 = vadd.f32 0.0, %v562
        %v564 = vpop.f32.mrf.mxu0
        %v565 = vadd.f32 0.0, %v564
        %566 = vmatmul.bf16.gmra.mxu0 %v482
        %v567 = vpop.f32.mrf.mxu0
        %v568 = vadd.f32 0.0, %v567
        %v569 = vpop.f32.mrf.mxu0
        %v570 = vadd.f32 0.0, %v569
        %571 = vmatmul.bf16.gmra.mxu0 %v485
        %v572 = vpop.f32.mrf.mxu0
        %v573 = vadd.f32 0.0, %v572
        %v574 = vpop.f32.mrf.mxu0
        %v575 = vadd.f32 0.0, %v574
        %576 = vmatmul.bf16.gmra.mxu0 %v488
        %v577 = vpop.f32.mrf.mxu0
        %v578 = vadd.f32 0.0, %v577
        %v579 = vpop.f32.mrf.mxu0
        %v580 = vadd.f32 0.0, %v579
        %581 = vmatmul.bf16.gmra.mxu0 %v491
        %v582 = vpop.f32.mrf.mxu0
        %v583 = vadd.f32 0.0, %v582
        %v584 = vpop.f32.mrf.mxu0
        %v585 = vadd.f32 0.0, %v584
        %586 = vmatmul.bf16.gmra.mxu0 %v494
        %v587 = vpop.f32.mrf.mxu0
        %v588 = vadd.f32 0.0, %v587
        %v589 = vpop.f32.mrf.mxu0
        %v590 = vadd.f32 0.0, %v589
        %591 = vdwg.mxu0
        %v592 = vadd.f32 %v288, %v513
        %v593 = vadd.f32 %v289, %v515
        %v594 = vadd.f32 %v290, %v518
        %v595 = vadd.f32 %v291, %v520
        %v596 = vadd.f32 %v292, %v523
        %v597 = vadd.f32 %v293, %v525
        %v598 = vadd.f32 %v294, %v528
        %v599 = vadd.f32 %v295, %v530
        %v600 = vadd.f32 %v296, %v533
        %v601 = vadd.f32 %v297, %v535
        %v602 = vadd.f32 %v298, %v538
        %v603 = vadd.f32 %v299, %v540
        %v604 = vadd.f32 %v300, %v543
        %v605 = vadd.f32 %v301, %v545
        %v606 = vadd.f32 %v302, %v548
        %v607 = vadd.f32 %v303, %v550
        %v608 = vadd.f32 %v304, %v553
        %v609 = vadd.f32 %v305, %v555
        %v610 = vadd.f32 %v306, %v558
        %v611 = vadd.f32 %v307, %v560
        %v612 = vadd.f32 %v308, %v563
        %v613 = vadd.f32 %v309, %v565
        %v614 = vadd.f32 %v310, %v568
        %v615 = vadd.f32 %v311, %v570
        %v616 = vadd.f32 %v312, %v573
        %v617 = vadd.f32 %v313, %v575
        %v618 = vadd.f32 %v314, %v578
        %v619 = vadd.f32 %v315, %v580
        %v620 = vadd.f32 %v316, %v583
        %v621 = vadd.f32 %v317, %v585
        %v622 = vadd.f32 %v318, %v588
        %v623 = vadd.f32 %v319, %v590
        %624 = vst [vmem:[#allocation2] sm:$0xff] %v592
        %625 = vst [vmem:[#allocation2 + $0x8] sm:$0xff] %v593
        %626 = vst [vmem:[#allocation2 + $0x10] sm:$0xff] %v594
        %627 = vst [vmem:[#allocation2 + $0x18] sm:$0xff] %v595
        %628 = vst [vmem:[#allocation2 + $0x20] sm:$0xff] %v596
        %629 = vst [vmem:[#allocation2 + $0x28] sm:$0xff] %v597
        %630 = vst [vmem:[#allocation2 + $0x30] sm:$0xff] %v598
        %631 = vst [vmem:[#allocation2 + $0x38] sm:$0xff] %v599
        %632 = vst [vmem:[#allocation2 + $0x40] sm:$0xff] %v600
        %633 = vst [vmem:[#allocation2 + $0x48] sm:$0xff] %v601
        %634 = vst [vmem:[#allocation2 + $0x50] sm:$0xff] %v602
        %635 = vst [vmem:[#allocation2 + $0x58] sm:$0xff] %v603
        %636 = vst [vmem:[#allocation2 + $0x60] sm:$0xff] %v604
        %637 = vst [vmem:[#allocation2 + $0x68] sm:$0xff] %v605
        %638 = vst [vmem:[#allocation2 + $0x70] sm:$0xff] %v606
        %639 = vst [vmem:[#allocation2 + $0x78] sm:$0xff] %v607
        %640 = vst [vmem:[#allocation2 + $0x80] sm:$0xff] %v608
        %641 = vst [vmem:[#allocation2 + $0x88] sm:$0xff] %v609
        %642 = vst [vmem:[#allocation2 + $0x90] sm:$0xff] %v610
        %643 = vst [vmem:[#allocation2 + $0x98] sm:$0xff] %v611
        %644 = vst [vmem:[#allocation2 + $0xa0] sm:$0xff] %v612
        %645 = vst [vmem:[#allocation2 + $0xa8] sm:$0xff] %v613
        %646 = vst [vmem:[#allocation2 + $0xb0] sm:$0xff] %v614
        %647 = vst [vmem:[#allocation2 + $0xb8] sm:$0xff] %v615
        %648 = vst [vmem:[#allocation2 + $0xc0] sm:$0xff] %v616
        %649 = vst [vmem:[#allocation2 + $0xc8] sm:$0xff] %v617
        %650 = vst [vmem:[#allocation2 + $0xd0] sm:$0xff] %v618
        %651 = vst [vmem:[#allocation2 + $0xd8] sm:$0xff] %v619
        %652 = vst [vmem:[#allocation2 + $0xe0] sm:$0xff] %v620
        %653 = vst [vmem:[#allocation2 + $0xe8] sm:$0xff] %v621
        %654 = vst [vmem:[#allocation2 + $0xf0] sm:$0xff] %v622
        %655 = vst [vmem:[#allocation2 + $0xf8] sm:$0xff] %v623
        // Predicated region
        $region37: #{tpu_custom_call.1} parent=31 // pred_check
          %p656 = pneg %p252
        $region38: #{tpu_custom_call.1} parent=31 // pred_check_branch
          %658 = sbr.rel (%p656) target = $region40
        $region39: #{tpu_custom_call.1} parent=31 // pred_region
          %v659 = vld [vmem:[#allocation2] sm:$0xff]
          %v660 = vld [vmem:[#allocation2 + $0x8] sm:$0xff]
          %v661 = vld [vmem:[#allocation2 + $0x10] sm:$0xff]
          %v662 = vld [vmem:[#allocation2 + $0x18] sm:$0xff]
          %v663 = vld [vmem:[#allocation2 + $0x20] sm:$0xff]
          %v664 = vld [vmem:[#allocation2 + $0x28] sm:$0xff]
          %v665 = vld [vmem:[#allocation2 + $0x30] sm:$0xff]
          %v666 = vld [vmem:[#allocation2 + $0x38] sm:$0xff]
          %v667 = vld [vmem:[#allocation2 + $0x40] sm:$0xff]
          %v668 = vld [vmem:[#allocation2 + $0x48] sm:$0xff]
          %v669 = vld [vmem:[#allocation2 + $0x50] sm:$0xff]
          %v670 = vld [vmem:[#allocation2 + $0x58] sm:$0xff]
          %v671 = vld [vmem:[#allocation2 + $0x60] sm:$0xff]
          %v672 = vld [vmem:[#allocation2 + $0x68] sm:$0xff]
          %v673 = vld [vmem:[#allocation2 + $0x70] sm:$0xff]
          %v674 = vld [vmem:[#allocation2 + $0x78] sm:$0xff]
          %v675 = vld [vmem:[#allocation2 + $0x80] sm:$0xff]
          %v676 = vld [vmem:[#allocation2 + $0x88] sm:$0xff]
          %v677 = vld [vmem:[#allocation2 + $0x90] sm:$0xff]
          %v678 = vld [vmem:[#allocation2 + $0x98] sm:$0xff]
          %v679 = vld [vmem:[#allocation2 + $0xa0] sm:$0xff]
          %v680 = vld [vmem:[#allocation2 + $0xa8] sm:$0xff]
          %v681 = vld [vmem:[#allocation2 + $0xb0] sm:$0xff]
          %v682 = vld [vmem:[#allocation2 + $0xb8] sm:$0xff]
          %v683 = vld [vmem:[#allocation2 + $0xc0] sm:$0xff]
          %v684 = vld [vmem:[#allocation2 + $0xc8] sm:$0xff]
          %v685 = vld [vmem:[#allocation2 + $0xd0] sm:$0xff]
          %v686 = vld [vmem:[#allocation2 + $0xd8] sm:$0xff]
          %v687 = vld [vmem:[#allocation2 + $0xe0] sm:$0xff]
          %v688 = vld [vmem:[#allocation2 + $0xe8] sm:$0xff]
          %v689 = vld [vmem:[#allocation2 + $0xf0] sm:$0xff]
          %v690 = vld [vmem:[#allocation2 + $0xf8] sm:$0xff]
          %v691 = vld [vmem:[%s249] sm:$0x1]
          %v693 = vperm.slane %v691, 0
          %v695 = vadd.f32 %v659, %v693
          %v696 = vadd.f32 %v660, %v693
          %v697 = vadd.f32 %v661, %v693
          %v698 = vadd.f32 %v662, %v693
          %v699 = vadd.f32 %v663, %v693
          %v700 = vadd.f32 %v664, %v693
          %v701 = vadd.f32 %v665, %v693
          %v702 = vadd.f32 %v666, %v693
          %v703 = vadd.f32 %v667, %v693
          %v704 = vadd.f32 %v668, %v693
          %v705 = vadd.f32 %v669, %v693
          %v706 = vadd.f32 %v670, %v693
          %v707 = vadd.f32 %v671, %v693
          %v708 = vadd.f32 %v672, %v693
          %v709 = vadd.f32 %v673, %v693
          %v710 = vadd.f32 %v674, %v693
          %v711 = vadd.f32 %v675, %v693
          %v712 = vadd.f32 %v676, %v693
          %v713 = vadd.f32 %v677, %v693
          %v714 = vadd.f32 %v678, %v693
          %v715 = vadd.f32 %v679, %v693
          %v716 = vadd.f32 %v680, %v693
          %v717 = vadd.f32 %v681, %v693
          %v718 = vadd.f32 %v682, %v693
          %v719 = vadd.f32 %v683, %v693
          %v720 = vadd.f32 %v684, %v693
          %v721 = vadd.f32 %v685, %v693
          %v722 = vadd.f32 %v686, %v693
          %v723 = vadd.f32 %v687, %v693
          %v724 = vadd.f32 %v688, %v693
          %v725 = vadd.f32 %v689, %v693
          %v726 = vadd.f32 %v690, %v693
          %v727 = vmax.f32 %v695, 0.0
          %v728 = vmax.f32 %v696, 0.0
          %v729 = vmax.f32 %v697, 0.0
          %v730 = vmax.f32 %v698, 0.0
          %v731 = vmax.f32 %v699, 0.0
          %v732 = vmax.f32 %v700, 0.0
          %v733 = vmax.f32 %v701, 0.0
          %v734 = vmax.f32 %v702, 0.0
          %v735 = vmax.f32 %v703, 0.0
          %v736 = vmax.f32 %v704, 0.0
          %v737 = vmax.f32 %v705, 0.0
          %v738 = vmax.f32 %v706, 0.0
          %v739 = vmax.f32 %v707, 0.0
          %v740 = vmax.f32 %v708, 0.0
          %v741 = vmax.f32 %v709, 0.0
          %v742 = vmax.f32 %v710, 0.0
          %v743 = vmax.f32 %v711, 0.0
          %v744 = vmax.f32 %v712, 0.0
          %v745 = vmax.f32 %v713, 0.0
          %v746 = vmax.f32 %v714, 0.0
          %v747 = vmax.f32 %v715, 0.0
          %v748 = vmax.f32 %v716, 0.0
          %v749 = vmax.f32 %v717, 0.0
          %v750 = vmax.f32 %v718, 0.0
          %v751 = vmax.f32 %v719, 0.0
          %v752 = vmax.f32 %v720, 0.0
          %v753 = vmax.f32 %v721, 0.0
          %v754 = vmax.f32 %v722, 0.0
          %v755 = vmax.f32 %v723, 0.0
          %v756 = vmax.f32 %v724, 0.0
          %v757 = vmax.f32 %v725, 0.0
          %v758 = vmax.f32 %v726, 0.0
          %v759 = vpack.c.bf16 %v727, %v727
          %v760 = vpack.c.bf16 %v728, %v728
          %v761 = vpack.c.bf16 %v729, %v729
          %v762 = vpack.c.bf16 %v730, %v730
          %v763 = vpack.c.bf16 %v731, %v731
          %v764 = vpack.c.bf16 %v732, %v732
          %v765 = vpack.c.bf16 %v733, %v733
          %v766 = vpack.c.bf16 %v734, %v734
          %v767 = vpack.c.bf16 %v735, %v735
          %v768 = vpack.c.bf16 %v736, %v736
          %v769 = vpack.c.bf16 %v737, %v737
          %v770 = vpack.c.bf16 %v738, %v738
          %v771 = vpack.c.bf16 %v739, %v739
          %v772 = vpack.c.bf16 %v740, %v740
          %v773 = vpack.c.bf16 %v741, %v741
          %v774 = vpack.c.bf16 %v742, %v742
          %v775 = vpack.c.bf16 %v743, %v743
          %v776 = vpack.c.bf16 %v744, %v744
          %v777 = vpack.c.bf16 %v745, %v745
          %v778 = vpack.c.bf16 %v746, %v746
          %v779 = vpack.c.bf16 %v747, %v747
          %v780 = vpack.c.bf16 %v748, %v748
          %v781 = vpack.c.bf16 %v749, %v749
          %v782 = vpack.c.bf16 %v750, %v750
          %v783 = vpack.c.bf16 %v751, %v751
          %v784 = vpack.c.bf16 %v752, %v752
          %v785 = vpack.c.bf16 %v753, %v753
          %v786 = vpack.c.bf16 %v754, %v754
          %v787 = vpack.c.bf16 %v755, %v755
          %v788 = vpack.c.bf16 %v756, %v756
          %v789 = vpack.c.bf16 %v757, %v757
          %v790 = vpack.c.bf16 %v758, %v758
          %791 = vst [vmem:[%s228] sm:$0xf] %v759
          %792 = vst [vmem:[%s228 + $0x4] sm:$0xf] %v760
          %793 = vst [vmem:[%s228 + $0x8] sm:$0xf] %v761
          %794 = vst [vmem:[%s228 + $0xc] sm:$0xf] %v762
          %795 = vst [vmem:[%s228 + $0x10] sm:$0xf] %v763
          %796 = vst [vmem:[%s228 + $0x14] sm:$0xf] %v764
          %797 = vst [vmem:[%s228 + $0x18] sm:$0xf] %v765
          %798 = vst [vmem:[%s228 + $0x1c] sm:$0xf] %v766
          %799 = vst [vmem:[%s228 + $0x20] sm:$0xf] %v767
          %800 = vst [vmem:[%s228 + $0x24] sm:$0xf] %v768
          %801 = vst [vmem:[%s228 + $0x28] sm:$0xf] %v769
          %802 = vst [vmem:[%s228 + $0x2c] sm:$0xf] %v770
          %803 = vst [vmem:[%s228 + $0x30] sm:$0xf] %v771
          %804 = vst [vmem:[%s228 + $0x34] sm:$0xf] %v772
          %805 = vst [vmem:[%s228 + $0x38] sm:$0xf] %v773
          %806 = vst [vmem:[%s228 + $0x3c] sm:$0xf] %v774
          %807 = vst [vmem:[%s228 + $0x40] sm:$0xf] %v775
          %808 = vst [vmem:[%s228 + $0x44] sm:$0xf] %v776
          %809 = vst [vmem:[%s228 + $0x48] sm:$0xf] %v777
          %810 = vst [vmem:[%s228 + $0x4c] sm:$0xf] %v778
          %811 = vst [vmem:[%s228 + $0x50] sm:$0xf] %v779
          %812 = vst [vmem:[%s228 + $0x54] sm:$0xf] %v780
          %813 = vst [vmem:[%s228 + $0x58] sm:$0xf] %v781
          %814 = vst [vmem:[%s228 + $0x5c] sm:$0xf] %v782
          %815 = vst [vmem:[%s228 + $0x60] sm:$0xf] %v783
          %816 = vst [vmem:[%s228 + $0x64] sm:$0xf] %v784
          %817 = vst [vmem:[%s228 + $0x68] sm:$0xf] %v785
          %818 = vst [vmem:[%s228 + $0x6c] sm:$0xf] %v786
          %819 = vst [vmem:[%s228 + $0x70] sm:$0xf] %v787
          %820 = vst [vmem:[%s228 + $0x74] sm:$0xf] %v788
          %821 = vst [vmem:[%s228 + $0x78] sm:$0xf] %v789
          %822 = vst [vmem:[%s228 + $0x7c] sm:$0xf] %v790
        $region40: #{tpu_custom_call.1} parent=31 // pred_fallthru
          _
        %s823 = sand.u32 %s128, 1
        %s824 = scalar_lea.sflag [#allocation4], %s823
        %s825 = sand.u32 %s128, 1
        %s826 = smul.addr %s825, 128
        %s827 = scalar_lea.vmem [#allocation3], %s826
        // Predicated region
        $region41: #{tpu_custom_call.1} parent=31 // pred_check
          %p828 = pneg %p138
        $region42: #{tpu_custom_call.1} parent=31 // pred_check_branch
          %830 = sbr.rel (%p828) target = $region44
        $region43: #{tpu_custom_call.1} parent=31 // pred_region
          %s831 = smul.u32 32, %s22
          %833 = vsyncadd %s824, 0
          %s834 = sadd.s32 %s23, %s831
          %s835 = smul.addr %s834, 4
          %s836 = scalar_lea.hbm %s3, %s835
          %s837 = sshll.u32 %s827, 4
          %s838 = int_to_ptr.vmem [resolvable:$true] %s837
          %s839 = sshll.u32 %s836, 4
          %s840 = int_to_ptr.hbm [resolvable:$true] %s839
          %845 = dma.vmem_to_hbm [thread:$0]  %s838, 2048, %s840, %s824, 64, 64, 4
        $region44: #{tpu_custom_call.1} parent=31 // pred_fallthru
          _
      $region32: #{tpu_custom_call.1} parent=5 // pred_fallthru
        _
      %p846 = scmp.le.s32.totalorder 2, %s12
      // Predicated region
      $region45: #{tpu_custom_call.1} parent=5 // pred_check
        %p847 = pneg %p846
      $region46: #{tpu_custom_call.1} parent=5 // pred_check_branch
        %849 = sbr.rel (%p847) target = $region48
      $region47: #{tpu_custom_call.1} parent=5 // pred_region
        %s850 = ssub.s32 %s12, 2
        // Predicated region
        $region49: #{tpu_custom_call.1} parent=47 // pred_check
          %p851 = pneg %p144
        $region50: #{tpu_custom_call.1} parent=47 // pred_check_branch
          %853 = sbr.rel (%p851) target = $region52
        $region51: #{tpu_custom_call.1} parent=47 // pred_region
          %s854 = sand.u32 %s129, 1
          %s855 = scalar_lea.sflag [#allocation4], %s854
          %s856 = sand.u32 %s129, 1
          %s857 = smul.addr %s856, 128
          %s858 = scalar_lea.vmem [#allocation3], %s857
          %860 = dma.done %s855, 2048
        $region52: #{tpu_custom_call.1} parent=47 // pred_fallthru
          _
      $region48: #{tpu_custom_call.1} parent=5 // pred_fallthru
        _
    $region6: #{tpu_custom_call.1} parent=1 // loop_footer
      %s16 = sadd.s32 1, %s12
    $region7: #{tpu_custom_call.1} parent=1 // loop_footer_branch
      %11 = sbr.rel target = $region3
    $region8: #{tpu_custom_call.1} parent=1 // loop_exit
      _
    %861 = vsyncpa [#allocation4], 1
    %s862 = scalar_lea.sflag [#allocation4], 1
    %863 = vsyncpa %s862, 1

</llo_original>
